<compile_context>
chip_gen: v5e
topology: v5e:2x2
jax: 0.10.0
libtpu: 0.0.40
codegen_flags: <defaults>
</compile_context>

<pallas_src>
import functools

import jax
import jax.numpy as jnp
from jax.experimental import pallas as pl
from jax.experimental.pallas import tpu as pltpu


def _dice_partials_kernel(o_ref, t_ref, tp_ref, so_ref, st_ref, *,
                          rows, r_tile, mask_rows):
    """Grid = (batch, row-tiles). Emits per-batch (C, 128) partial sums.

    Input blocks are (1, C, r_tile, 128); the three outputs use (1, C, 128)
    blocks indexed only by the batch axis, so they stay resident in VMEM
    across the row-tile (reduction) axis and are flushed to HBM once per
    batch.  No state is carried across batches -> batch axis is "parallel".
    """
    j = pl.program_id(1)

    @pl.when(j == 0)
    def _():
        tp_ref[...] = jnp.zeros_like(tp_ref)
        so_ref[...] = jnp.zeros_like(so_ref)
        st_ref[...] = jnp.zeros_like(st_ref)

    # Stream in native dtype over HBM; upcast to f32 only for accumulation.
    o = o_ref[0].astype(jnp.float32)          # (C, r_tile, 128)
    t = t_ref[0].astype(jnp.float32)

    def _accumulate(o, t):
        # 1 mul + 3 adds per element; reduce only over the sublane-major row
        # axis (mostly VALU vreg adds).  The cross-lane reduce is deferred to
        # the plain-JAX epilogue.
        tp_ref[0] += jnp.sum(o * t, axis=1)   # (C, 128)
        so_ref[0] += jnp.sum(o, axis=1)
        st_ref[0] += jnp.sum(t, axis=1)

    if mask_rows:
        last = pl.num_programs(1) - 1

        @pl.when(j < last)
        def _():
            _accumulate(o, t)

        @pl.when(j == last)
        def _():
            # Only the final (ragged) row tile pays the mask.  It reads past
            # `rows` (unspecified contents), so mask o and t BEFORE the
            # multiply/accumulate (zeros are neutral for all three sums).
            row = j * r_tile + jax.lax.broadcasted_iota(
                jnp.int32, (r_tile, 128), 0)
            valid = (row < rows)[None, :, :]
            _accumulate(jnp.where(valid, o, 0.0), jnp.where(valid, t, 0.0))
    else:
        _accumulate(o, t)


def _choose_row_tile(num_classes, rows, itemsize, target_block_bytes):
    """Pick the row tile: big blocks, dtype-aware sublane quantum, VMEM-safe."""
    sub = max(8, 32 // max(1, itemsize))          # 8 for f32, 16 for bf16, ...
    bytes_per_row = num_classes * 128 * itemsize
    budget_rows = max(sub, (target_block_bytes // bytes_per_row) // sub * sub)
    if rows <= budget_rows:
        return rows, False                        # full dim -> no masking
    return budget_rows, (rows % budget_rows != 0)


def dice_loss(outputs, targets, *, class_dim=1, eps=1e-7,
              target_block_bytes=4 * 1024 * 1024):
    """DiceLoss forward (mode='macro', threshold=None). Returns a scalar f32."""
    assert outputs.shape == targets.shape
    nd = outputs.ndim
    assert nd >= 2
    cd = class_dim % nd
    if cd != 1:
        # General path: bring the class dim to axis 1 (no-op for the default).
        outputs = jnp.moveaxis(outputs, cd, 1)
        targets = jnp.moveaxis(targets, cd, 1)

    n_batch, num_classes = int(outputs.shape[0]), int(outputs.shape[1])
    hw = 1
    for d in outputs.shape[2:]:
        hw *= int(d)
    hw = max(hw, 1)

    o3 = outputs.reshape(n_batch, num_classes, hw)
    t3 = targets.reshape(n_batch, num_classes, hw)

    # Degenerate tiny-spatial case: pad up to a single 128-lane row (cheap).
    if hw < 128:
        pad = 128 - hw
        o3 = jnp.pad(o3, ((0, 0), (0, 0), (0, pad)))
        t3 = jnp.pad(t3, ((0, 0), (0, 0), (0, pad)))
        hw = 128

    # No full-array jnp.pad: the kernel covers the 128-aligned prefix; the
    # (<128 elements per (n, c)) lane tail is folded in with plain JAX below.
    main = (hw // 128) * 128
    tail = hw - main
    rows = main // 128

    if tail:
        o_main, t_main = o3[:, :, :main], t3[:, :, :main]
    else:
        o_main, t_main = o3, t3
    o4 = o_main.reshape(n_batch, num_classes, rows, 128)
    t4 = t_main.reshape(n_batch, num_classes, rows, 128)

    item_o = jnp.dtype(o4.dtype).itemsize
    item_t = jnp.dtype(t4.dtype).itemsize
    itemsize = max(item_o, item_t)
    r_tile, mask_rows = _choose_row_tile(num_classes, rows, itemsize,
                                         target_block_bytes)
    num_row_tiles = pl.cdiv(rows, r_tile)

    # Explicit VMEM budget: 2 inputs x 2 pipeline buffers + outputs + margin,
    # capped well under v7x's 64 MiB physical VMEM.
    in_block_bytes = num_classes * r_tile * 128 * (item_o + item_t)
    out_block_bytes = 3 * num_classes * 128 * 4
    vmem_limit = int(min(56 << 20,
                         max(16 << 20,
                             2 * in_block_bytes + 2 * out_block_bytes
                             + (4 << 20))))

    elems = n_batch * num_classes * rows * 128
    cost = pl.CostEstimate(
        flops=4 * elems,
        transcendentals=0,
        bytes_accessed=elems * (item_o + item_t) + n_batch * out_block_bytes)

    kernel = functools.partial(_dice_partials_kernel, rows=rows,
                               r_tile=r_tile, mask_rows=mask_rows)

    part_shape = jax.ShapeDtypeStruct((n_batch, num_classes, 128), jnp.float32)
    part_spec = pl.BlockSpec((1, num_classes, 128), lambda n, j: (n, 0, 0))
    in_spec = pl.BlockSpec((1, num_classes, r_tile, 128),
                           lambda n, j: (n, 0, j, 0))

    tp_p, so_p, st_p = pl.pallas_call(
        kernel,
        out_shape=(part_shape, part_shape, part_shape),
        grid_spec=pltpu.PrefetchScalarGridSpec(
            num_scalar_prefetch=0,
            grid=(n_batch, num_row_tiles),
            in_specs=[in_spec, in_spec],
            out_specs=(part_spec, part_spec, part_spec),
        ),
        compiler_params=pltpu.CompilerParams(
            dimension_semantics=("parallel", "arbitrary"),
            vmem_limit_bytes=vmem_limit),
        cost_estimate=cost,
    )(o4, t4)

    # Tiny epilogue in plain JAX: lane + batch reduce, tail fold-in, dice.
    tp = jnp.sum(tp_p, axis=(0, 2))            # (C,)
    so = jnp.sum(so_p, axis=(0, 2))
    st = jnp.sum(st_p, axis=(0, 2))

    if tail:
        o_t = o3[:, :, main:].astype(jnp.float32)
        t_t = t3[:, :, main:].astype(jnp.float32)
        tp = tp + jnp.sum(o_t * t_t, axis=(0, 2))
        so = so + jnp.sum(o_t, axis=(0, 2))
        st = st + jnp.sum(t_t, axis=(0, 2))

    union = so + st - tp                        # tp + fp + fn
    # 2*tp + fp + fn == sum(o) + sum(t).  Exact ==0 compare matches catalyst.
    score = (2.0 * tp + eps * (union == 0.0).astype(jnp.float32)) / (
        so + st + eps)
    return 1.0 - jnp.mean(score)


def _dice_loss_ref(outputs, targets, class_dim=1, eps=1e-7):
    """Pure-JAX reference mirroring catalyst's dice(mode='macro')."""
    o = outputs.astype(jnp.float32)
    t = targets.astype(jnp.float32)
    dims = tuple(d for d in range(o.ndim) if d != (class_dim % o.ndim))
    tp = jnp.sum(o * t, axis=dims)
    fp = jnp.sum(o * (1.0 - t), axis=dims)
    fn = jnp.sum(t * (1.0 - o), axis=dims)
    union = tp + fp + fn
    score = (2.0 * tp + eps * (union == 0.0).astype(jnp.float32)) / (
        2.0 * tp + fp + fn + eps)
    return 1.0 - jnp.mean(score)


if __name__ == "__main__":
    key = jax.random.PRNGKey(0)
    k1, k2, k3, k4, k5, k6 = jax.random.split(key, 6)

    # Primary case: NCHW, batch=2, classes=4, spatial=16x16 (hw % 128 == 0).
    outputs = jax.nn.sigmoid(jax.random.normal(k1, (2, 4, 16, 16), jnp.float32))
    targets = (jax.random.uniform(k2, (2, 4, 16, 16)) > 0.5).astype(jnp.float32)
    loss = jax.block_until_ready(dice_loss(outputs, targets))
    ref = jax.block_until_ready(_dice_loss_ref(outputs, targets))
    assert jnp.allclose(loss, ref, atol=1e-5, rtol=1e-5), (loss, ref)

    # Ragged spatial size (hw % 128 != 0): kernel on the 128-aligned prefix,
    # lane tail folded in with plain JAX (no full-array pad).
    o2 = jax.nn.sigmoid(jax.random.normal(k3, (2, 4, 10, 13), jnp.float32))
    t2 = (jax.random.uniform(k4, (2, 4, 10, 13)) > 0.5).astype(jnp.float32)
    l2 = jax.block_until_ready(dice_loss(o2, t2))
    r2 = jax.block_until_ready(_dice_loss_ref(o2, t2))
    assert jnp.allclose(l2, r2, atol=1e-5, rtol=1e-5), (l2, r2)

    # Ragged row-tile path (rows % r_tile != 0) via a tiny block budget:
    # exercises the pl.when-guarded masked last tile.
    o3_ = jax.nn.sigmoid(jax.random.normal(k5, (1, 4, 40, 64), jnp.float32))
    t3_ = (jax.random.uniform(k6, (1, 4, 40, 64)) > 0.5).astype(jnp.float32)
    l3 = jax.block_until_ready(dice_loss(o3_, t3_, target_block_bytes=4096))
    r3 = jax.block_until_ready(_dice_loss_ref(o3_, t3_))
    assert jnp.allclose(l3, r3, atol=1e-5, rtol=1e-5), (l3, r3)

    print("KERNEL_OK")
</pallas_src>

<mosaic_0001>
module attributes {stable_mosaic.version = 11 : i64} {
  func.func @_dice_partials_kernel(%arg0: i32, %arg1: i32, %arg2: memref<1x4x2x128xf32, #tpu.memory_space<vmem>>, %arg3: memref<1x4x2x128xf32, #tpu.memory_space<vmem>>, %arg4: memref<1x4x128xf32, #tpu.memory_space<vmem>>, %arg5: memref<1x4x128xf32, #tpu.memory_space<vmem>>, %arg6: memref<1x4x128xf32, #tpu.memory_space<vmem>>) attributes {dimension_semantics = [#tpu.dimension_semantics<parallel>, #tpu.dimension_semantics<arbitrary>], iteration_bounds = array<i64: 2, 1>, scalar_prefetch = 0 : i64, scratch_operands = 0 : i64, tpu.core_type = #tpu.core_type<tc>, window_params = [{transform_indices = @transform_0, window_bounds = array<i64: 1, 4, 2, 128>}, {transform_indices = @transform_1, window_bounds = array<i64: 1, 4, 2, 128>}, {transform_indices = @transform_2, window_bounds = array<i64: 1, 4, 128>}, {transform_indices = @transform_3, window_bounds = array<i64: 1, 4, 128>}, {transform_indices = @transform_4, window_bounds = array<i64: 1, 4, 128>}]} {
    %c0_i32 = arith.constant 0 : i32
    %0 = arith.cmpi eq, %arg1, %c0_i32 : i32
    %1 = arith.extui %0 : i1 to i32
    %c0_i32_0 = arith.constant 0 : i32
    %2 = arith.cmpi ne, %1, %c0_i32_0 : i32
    scf.if %2 {
      %cst_28 = arith.constant 0.000000e+00 : f32
      %29 = vector.broadcast %cst_28 : f32 to vector<1x4x128xf32>
      %c0_29 = arith.constant 0 : index
      %c0_30 = arith.constant 0 : index
      %c0_31 = arith.constant 0 : index
      %30 = vector.load %arg4[%c0_29, %c0_30, %c0_31] : memref<1x4x128xf32, #tpu.memory_space<vmem>>, vector<1x4x128xf32>
      tpu.vector_store %arg4[%c0_29, %c0_30, %c0_31], %29 {strides = array<i32>} : memref<1x4x128xf32, #tpu.memory_space<vmem>>, vector<1x4x128xf32>,
      %cst_32 = arith.constant 0.000000e+00 : f32
      %31 = vector.broadcast %cst_32 : f32 to vector<1x4x128xf32>
      %c0_33 = arith.constant 0 : index
      %c0_34 = arith.constant 0 : index
      %c0_35 = arith.constant 0 : index
      %32 = vector.load %arg5[%c0_33, %c0_34, %c0_35] : memref<1x4x128xf32, #tpu.memory_space<vmem>>, vector<1x4x128xf32>
      tpu.vector_store %arg5[%c0_33, %c0_34, %c0_35], %31 {strides = array<i32>} : memref<1x4x128xf32, #tpu.memory_space<vmem>>, vector<1x4x128xf32>,
      %cst_36 = arith.constant 0.000000e+00 : f32
      %33 = vector.broadcast %cst_36 : f32 to vector<1x4x128xf32>
      %c0_37 = arith.constant 0 : index
      %c0_38 = arith.constant 0 : index
      %c0_39 = arith.constant 0 : index
      %34 = vector.load %arg6[%c0_37, %c0_38, %c0_39] : memref<1x4x128xf32, #tpu.memory_space<vmem>>, vector<1x4x128xf32>
      tpu.vector_store %arg6[%c0_37, %c0_38, %c0_39], %33 {strides = array<i32>} : memref<1x4x128xf32, #tpu.memory_space<vmem>>, vector<1x4x128xf32>,
    } else {
    }
    %c0 = arith.constant 0 : index
    %c0_1 = arith.constant 0 : index
    %c0_2 = arith.constant 0 : index
    %c0_3 = arith.constant 0 : index
    %3 = vector.load %arg2[%c0, %c0_1, %c0_2, %c0_3] : memref<1x4x2x128xf32, #tpu.memory_space<vmem>>, vector<1x4x2x128xf32>
    %4 = vector.shape_cast %3 : vector<1x4x2x128xf32> to vector<4x2x128xf32>
    %c0_4 = arith.constant 0 : index
    %c0_5 = arith.constant 0 : index
    %c0_6 = arith.constant 0 : index
    %c0_7 = arith.constant 0 : index
    %5 = vector.load %arg3[%c0_4, %c0_5, %c0_6, %c0_7] : memref<1x4x2x128xf32, #tpu.memory_space<vmem>>, vector<1x4x2x128xf32>
    %6 = vector.shape_cast %5 : vector<1x4x2x128xf32> to vector<4x2x128xf32>
    %c0_8 = arith.constant 0 : index
    %c0_9 = arith.constant 0 : index
    %c0_10 = arith.constant 0 : index
    %7 = vector.load %arg4[%c0_8, %c0_9, %c0_10] : memref<1x4x128xf32, #tpu.memory_space<vmem>>, vector<1x4x128xf32>
    %8 = vector.shape_cast %7 : vector<1x4x128xf32> to vector<4x128xf32>
    %9 = arith.mulf %4, %6 : vector<4x2x128xf32>
    %cst = arith.constant dense<0.000000e+00> : vector<4x128xf32>
    %10 = vector.multi_reduction <add>, %9, %cst [1] : vector<4x2x128xf32> to vector<4x128xf32>
    %11 = arith.addf %8, %10 : vector<4x128xf32>
    %c0_11 = arith.constant 0 : index
    %c0_12 = arith.constant 0 : index
    %c0_13 = arith.constant 0 : index
    %12 = vector.load %arg4[%c0_11, %c0_12, %c0_13] : memref<1x4x128xf32, #tpu.memory_space<vmem>>, vector<1x4x128xf32>
    %13 = vector.shape_cast %12 : vector<1x4x128xf32> to vector<4x128xf32>
    %14 = vector.shape_cast %11 : vector<4x128xf32> to vector<1x4x128xf32>
    tpu.vector_store %arg4[%c0_11, %c0_12, %c0_13], %14 {strides = array<i32>} : memref<1x4x128xf32, #tpu.memory_space<vmem>>, vector<1x4x128xf32>,
    %c0_14 = arith.constant 0 : index
    %c0_15 = arith.constant 0 : index
    %c0_16 = arith.constant 0 : index
    %15 = vector.load %arg5[%c0_14, %c0_15, %c0_16] : memref<1x4x128xf32, #tpu.memory_space<vmem>>, vector<1x4x128xf32>
    %16 = vector.shape_cast %15 : vector<1x4x128xf32> to vector<4x128xf32>
    %cst_17 = arith.constant dense<0.000000e+00> : vector<4x128xf32>
    %17 = vector.multi_reduction <add>, %4, %cst_17 [1] : vector<4x2x128xf32> to vector<4x128xf32>
    %18 = arith.addf %16, %17 : vector<4x128xf32>
    %c0_18 = arith.constant 0 : index
    %c0_19 = arith.constant 0 : index
    %c0_20 = arith.constant 0 : index
    %19 = vector.load %arg5[%c0_18, %c0_19, %c0_20] : memref<1x4x128xf32, #tpu.memory_space<vmem>>, vector<1x4x128xf32>
    %20 = vector.shape_cast %19 : vector<1x4x128xf32> to vector<4x128xf32>
    %21 = vector.shape_cast %18 : vector<4x128xf32> to vector<1x4x128xf32>
    tpu.vector_store %arg5[%c0_18, %c0_19, %c0_20], %21 {strides = array<i32>} : memref<1x4x128xf32, #tpu.memory_space<vmem>>, vector<1x4x128xf32>,
    %c0_21 = arith.constant 0 : index
    %c0_22 = arith.constant 0 : index
    %c0_23 = arith.constant 0 : index
    %22 = vector.load %arg6[%c0_21, %c0_22, %c0_23] : memref<1x4x128xf32, #tpu.memory_space<vmem>>, vector<1x4x128xf32>
    %23 = vector.shape_cast %22 : vector<1x4x128xf32> to vector<4x128xf32>
    %cst_24 = arith.constant dense<0.000000e+00> : vector<4x128xf32>
    %24 = vector.multi_reduction <add>, %6, %cst_24 [1] : vector<4x2x128xf32> to vector<4x128xf32>
    %25 = arith.addf %23, %24 : vector<4x128xf32>
    %c0_25 = arith.constant 0 : index
    %c0_26 = arith.constant 0 : index
    %c0_27 = arith.constant 0 : index
    %26 = vector.load %arg6[%c0_25, %c0_26, %c0_27] : memref<1x4x128xf32, #tpu.memory_space<vmem>>, vector<1x4x128xf32>
    %27 = vector.shape_cast %26 : vector<1x4x128xf32> to vector<4x128xf32>
    %28 = vector.shape_cast %25 : vector<4x128xf32> to vector<1x4x128xf32>
    tpu.vector_store %arg6[%c0_25, %c0_26, %c0_27], %28 {strides = array<i32>} : memref<1x4x128xf32, #tpu.memory_space<vmem>>, vector<1x4x128xf32>,
    return
  }
  func.func @transform_0(%arg0: i32, %arg1: i32) -> (i32, i32, i32, i32) {
    %c0_i32 = arith.constant 0 : i32
    %c0_i32_0 = arith.constant 0 : i32
    %c0_i32_1 = arith.constant 0 : i32
    return %arg0, %c0_i32, %arg1, %c0_i32_0 : i32, i32, i32, i32
  }
  func.func @transform_1(%arg0: i32, %arg1: i32) -> (i32, i32, i32, i32) {
    %c0_i32 = arith.constant 0 : i32
    %c0_i32_0 = arith.constant 0 : i32
    %c0_i32_1 = arith.constant 0 : i32
    return %arg0, %c0_i32, %arg1, %c0_i32_0 : i32, i32, i32, i32
  }
  func.func @transform_2(%arg0: i32, %arg1: i32) -> (i32, i32, i32) {
    %c0_i32 = arith.constant 0 : i32
    %c0_i32_0 = arith.constant 0 : i32
    %c0_i32_1 = arith.constant 0 : i32
    return %arg0, %c0_i32, %c0_i32_0 : i32, i32, i32
  }
  func.func @transform_3(%arg0: i32, %arg1: i32) -> (i32, i32, i32) {
    %c0_i32 = arith.constant 0 : i32
    %c0_i32_0 = arith.constant 0 : i32
    %c0_i32_1 = arith.constant 0 : i32
    return %arg0, %c0_i32, %c0_i32_0 : i32, i32, i32
  }
  func.func @transform_4(%arg0: i32, %arg1: i32) -> (i32, i32, i32) {
    %c0_i32 = arith.constant 0 : i32
    %c0_i32_0 = arith.constant 0 : i32
    %c0_i32_1 = arith.constant 0 : i32
    return %arg0, %c0_i32, %c0_i32_0 : i32, i32, i32
  }
}

</mosaic_0001>

<llo_original>
// kernel: tpu_custom_call.1
$region0: #{tpu_custom_call.1}
  #allocation0 [shape = 'u32[]', space=smem, size = 0x4, offset = 0x4, fixed_abs, tag = 'smem constant byte address 0x4 - core index']
  #allocation1 [shape = 'u32[72,128]{1,0:T(1,128)}', space=vmem, size = 0x9000, scoped, tag = 'internal scratch']
  %s0 = inlined_call_operand.hbm [shape: f32[2,4,2,128], index: 0, kind: input, shape index: {}]
  %s1 = inlined_call_operand.hbm [shape: f32[2,4,2,128], index: 1, kind: input, shape index: {}]
  %s2 = inlined_call_operand.hbm [shape: f32[2,4,128], index: 2, kind: output, shape index: {0}]
  %s3 = inlined_call_operand.hbm [shape: f32[2,4,128], index: 3, kind: output, shape index: {1}]
  %s4 = inlined_call_operand.hbm [shape: f32[2,4,128], index: 4, kind: output, shape index: {2}]
  %5 = xla_tuple %s2, %s3, %s4
  %s6 = sld [smem:[#allocation0]]
  $region69: #{tpu_custom_call.1} parent=0
    _
  %s8 = ssub.s32 1, %s6
  %s9 = scalar_select 0, %s8, %s6
  $region1: #{tpu_custom_call.1} parent=0
    #allocation2 [shape = 'u8[8192]{0}', space=vmem, size = 0x2000, scoped, tag = 'input window, operand 0']
    #allocation3 [shape = 's32[2]{0}', space=sflag, size = 0x8, scoped, tag = 'scoped memory for tpu_custom_call.1']
    #allocation4 [shape = 's32[2]{0}', space=sflag, size = 0x8, scoped, tag = 'scoped memory for tpu_custom_call.1']
    #allocation5 [shape = 'u8[8192]{0}', space=vmem, size = 0x2000, scoped, tag = 'input window, operand 1']
    #allocation6 [shape = 's32[2]{0}', space=sflag, size = 0x8, scoped, tag = 'scoped memory for tpu_custom_call.1']
    #allocation7 [shape = 'u8[4096]{0}', space=vmem, size = 0x1000, scoped, tag = 'output window, operand 0']
    #allocation8 [shape = 'u8[4096]{0}', space=vmem, size = 0x1000, scoped, tag = 'output window, operand 1']
    #allocation9 [shape = 's32[2]{0}', space=sflag, size = 0x8, scoped, tag = 'scoped memory for tpu_custom_call.1']
    #allocation10 [shape = 'u8[4096]{0}', space=vmem, size = 0x1000, scoped, tag = 'output window, operand 2']
    %10 = vsyncpa [#allocation3], 0
    %s11 = scalar_lea.sflag [#allocation3], 1
    %12 = vsyncpa %s11, 0
    %13 = vsyncpa [#allocation6], 0
    %s14 = scalar_lea.sflag [#allocation6], 1
    %15 = vsyncpa %s14, 0
    %16 = vsyncpa [#allocation4], 0
    %s17 = scalar_lea.sflag [#allocation4], 1
    %18 = vsyncpa %s17, 0
    %19 = vsyncpa [#allocation9], 0
    %s20 = scalar_lea.sflag [#allocation9], 1
    %21 = vsyncpa %s20, 0
    loop: start=0, step=1, limit=4
    $region2: #{tpu_custom_call.1} parent=1 // loop_pre_header
      _
    $region3: #{tpu_custom_call.1} parent=1 // loop_header
      %s23 = sphi 0, %s27
      %p24 = scmp.ge.s32.totalorder %s23, 4
      %s30 = sphi 0, %s42
      %s31 = sphi 0, %s38
      %s32 = sphi 0, %s30
      %s33 = sphi 0, %s31
      %s34 = sphi 0, %s32
      %s35 = sphi 0, %s33
      %s47 = sphi 0, %s49
      %s50 = sphi 0, %s47
      %s51 = sphi 0, %s50
      %s67 = sphi 0, %s51
      %s75 = sphi 0, %s77
      %s78 = sphi 0, %s75
      %s79 = sphi 0, %s78
      %s95 = sphi 0, %s79
      %s101 = sphi 0, %s103
      %s104 = sphi 0, %s101
      %s105 = sphi 0, %s104
      %s121 = sphi 0, %s105
      %s127 = sphi 0, %s129
      %s130 = sphi 0, %s127
      %s131 = sphi 0, %s130
      %s147 = sphi 0, %s131
      %s153 = sphi 0, %s155
      %s156 = sphi 0, %s153
      %s157 = sphi 0, %s156
      %s173 = sphi 0, %s157
    $region4: #{tpu_custom_call.1} parent=1 // loop_header_branch
      %26 = sbr.rel (%p24) target = $region8
    $region5: #{tpu_custom_call.1} parent=1 // loop_body
      %s28 = ssub.s32 %s23, 1
      %s29 = ssub.s32 %s23, 2
      %s36 = sadd.s32 1, %s31
      %p37 = scmp.ge.s32.totalorder %s36, 1
      %s38 = scalar_select %p37, 0, %s36
      %s39 = sadd.s32 1, %s30
      %s40 = scalar_select %p37, %s39, %s30
      %p41 = scmp.ge.s32.totalorder %s40, 2
      %s42 = scalar_select %p41, 0, %s40
      %s43 = ssub.s32 %s30, %s42
      %s44 = ssub.s32 %s31, %s38
      %s45 = sor.u32 %s43, %s44
      %p46 = scmp.eq.s32.totalorder %s45, 0
      %s48 = sadd.s32 %s47, 1
      %s49 = scalar_select %p46, %s47, %s48
      %p52 = pneg %p46
      %p53 = scmp.eq.s32.totalorder %s23, 1
      %p54 = por %p52, %p53
      %p55 = scmp.ne.s32.totalorder %s47, %s50
      %p56 = scmp.eq.s32.totalorder %s23, 0
      %p57 = por %p55, %p56
      %p58 = scmp.ne.s32.totalorder %s47, %s50
      %p59 = scmp.eq.s32.totalorder %s28, 1
      %p60 = por %p58, %p59
      %p61 = scmp.ne.s32.totalorder %s50, %s51
      %p62 = scmp.eq.s32.totalorder %s28, 0
      %p63 = por %p61, %p62
      %p64 = scmp.ne.s32.totalorder %s50, %s51
      %p65 = scmp.eq.s32.totalorder %s29, 1
      %p66 = por %p64, %p65
      %p68 = scmp.ne.s32.totalorder %s51, %s67
      %p69 = scmp.eq.s32.totalorder %s29, 0
      %p70 = por %p68, %p69
      %s71 = ssub.s32 %s30, %s42
      %s72 = ssub.s32 %s31, %s38
      %s73 = sor.u32 %s71, %s72
      %p74 = scmp.eq.s32.totalorder %s73, 0
      %s76 = sadd.s32 %s75, 1
      %s77 = scalar_select %p74, %s75, %s76
      %p80 = pneg %p74
      %p81 = scmp.eq.s32.totalorder %s23, 1
      %p82 = por %p80, %p81
      %p83 = scmp.ne.s32.totalorder %s75, %s78
      %p84 = scmp.eq.s32.totalorder %s23, 0
      %p85 = por %p83, %p84
      %p86 = scmp.ne.s32.totalorder %s75, %s78
      %p87 = scmp.eq.s32.totalorder %s28, 1
      %p88 = por %p86, %p87
      %p89 = scmp.ne.s32.totalorder %s78, %s79
      %p90 = scmp.eq.s32.totalorder %s28, 0
      %p91 = por %p89, %p90
      %p92 = scmp.ne.s32.totalorder %s78, %s79
      %p93 = scmp.eq.s32.totalorder %s29, 1
      %p94 = por %p92, %p93
      %p96 = scmp.ne.s32.totalorder %s79, %s95
      %p97 = scmp.eq.s32.totalorder %s29, 0
      %p98 = por %p96, %p97
      %s99 = ssub.s32 %s30, %s42
      %p100 = scmp.eq.s32.totalorder %s99, 0
      %s102 = sadd.s32 %s101, 1
      %s103 = scalar_select %p100, %s101, %s102
      %p106 = pneg %p100
      %p107 = scmp.eq.s32.totalorder %s23, 1
      %p108 = por %p106, %p107
      %p109 = scmp.ne.s32.totalorder %s101, %s104
      %p110 = scmp.eq.s32.totalorder %s23, 0
      %p111 = por %p109, %p110
      %p112 = scmp.ne.s32.totalorder %s101, %s104
      %p113 = scmp.eq.s32.totalorder %s28, 1
      %p114 = por %p112, %p113
      %p115 = scmp.ne.s32.totalorder %s104, %s105
      %p116 = scmp.eq.s32.totalorder %s28, 0
      %p117 = por %p115, %p116
      %p118 = scmp.ne.s32.totalorder %s104, %s105
      %p119 = scmp.eq.s32.totalorder %s29, 1
      %p120 = por %p118, %p119
      %p122 = scmp.ne.s32.totalorder %s105, %s121
      %p123 = scmp.eq.s32.totalorder %s29, 0
      %p124 = por %p122, %p123
      %s125 = ssub.s32 %s30, %s42
      %p126 = scmp.eq.s32.totalorder %s125, 0
      %s128 = sadd.s32 %s127, 1
      %s129 = scalar_select %p126, %s127, %s128
      %p132 = pneg %p126
      %p133 = scmp.eq.s32.totalorder %s23, 1
      %p134 = por %p132, %p133
      %p135 = scmp.ne.s32.totalorder %s127, %s130
      %p136 = scmp.eq.s32.totalorder %s23, 0
      %p137 = por %p135, %p136
      %p138 = scmp.ne.s32.totalorder %s127, %s130
      %p139 = scmp.eq.s32.totalorder %s28, 1
      %p140 = por %p138, %p139
      %p141 = scmp.ne.s32.totalorder %s130, %s131
      %p142 = scmp.eq.s32.totalorder %s28, 0
      %p143 = por %p141, %p142
      %p144 = scmp.ne.s32.totalorder %s130, %s131
      %p145 = scmp.eq.s32.totalorder %s29, 1
      %p146 = por %p144, %p145
      %p148 = scmp.ne.s32.totalorder %s131, %s147
      %p149 = scmp.eq.s32.totalorder %s29, 0
      %p150 = por %p148, %p149
      %s151 = ssub.s32 %s30, %s42
      %p152 = scmp.eq.s32.totalorder %s151, 0
      %s154 = sadd.s32 %s153, 1
      %s155 = scalar_select %p152, %s153, %s154
      %p158 = pneg %p152
      %p159 = scmp.eq.s32.totalorder %s23, 1
      %p160 = por %p158, %p159
      %p161 = scmp.ne.s32.totalorder %s153, %s156
      %p162 = scmp.eq.s32.totalorder %s23, 0
      %p163 = por %p161, %p162
      %p164 = scmp.ne.s32.totalorder %s153, %s156
      %p165 = scmp.eq.s32.totalorder %s28, 1
      %p166 = por %p164, %p165
      %p167 = scmp.ne.s32.totalorder %s156, %s157
      %p168 = scmp.eq.s32.totalorder %s28, 0
      %p169 = por %p167, %p168
      %p170 = scmp.ne.s32.totalorder %s156, %s157
      %p171 = scmp.eq.s32.totalorder %s29, 1
      %p172 = por %p170, %p171
      %p174 = scmp.ne.s32.totalorder %s157, %s173
      %p175 = scmp.eq.s32.totalorder %s29, 0
      %p176 = por %p174, %p175
      %p177 = scmp.le.s32.totalorder 1, %s23
      %p178 = scmp.lt.s32.totalorder %s23, 3
      %p179 = pnand %p177, %p178
      %p180 = pneg %p179
      // Predicated region
      $region9: #{tpu_custom_call.1} parent=5 // pred_check
        _
      $region10: #{tpu_custom_call.1} parent=5 // pred_check_branch
        %182 = sbr.rel (%p179) target = $region12
      $region11: #{tpu_custom_call.1} parent=5 // pred_region
        %s183 = ssub.s32 %s23, 1
      $region12: #{tpu_custom_call.1} parent=5 // pred_fallthru
        _
      %p184 = scmp.lt.s32.totalorder %s23, 2
      // Predicated region
      $region13: #{tpu_custom_call.1} parent=5 // pred_check
        %p185 = pneg %p184
      $region14: #{tpu_custom_call.1} parent=5 // pred_check_branch
        %187 = sbr.rel (%p185) target = $region16
      $region15: #{tpu_custom_call.1} parent=5 // pred_region
        // Predicated region
        $region17: #{tpu_custom_call.1} parent=15 // pred_check
          %p188 = pneg %p57
        $region18: #{tpu_custom_call.1} parent=15 // pred_check_branch
          %190 = sbr.rel (%p188) target = $region20
        $region19: #{tpu_custom_call.1} parent=15 // pred_region
          %s191 = sand.u32 %s47, 1
          %s192 = scalar_lea.sflag [#allocation3], %s191
          %s193 = sand.u32 %s47, 1
          %s194 = smul.addr %s193, 8
          %s195 = scalar_lea.vmem [#allocation2], %s194
          %197 = vsyncadd %s192, 0
          %s198 = smul.addr %s30, 4
          %s199 = sadd.s32 %s31, %s198
          %s200 = smul.addr %s199, 2
          %s201 = scalar_lea.hbm %s0, %s200
          %s202 = sshll.u32 %s201, 4
          %s203 = int_to_ptr.hbm [resolvable:$true] %s202
          %s204 = sshll.u32 %s195, 4
          %s205 = int_to_ptr.vmem [resolvable:$true] %s204
          %210 = dma.hbm_to_vmem [thread:$0]  %s203, 128, %s205, %s192, 32, 32, 2
        $region20: #{tpu_custom_call.1} parent=15 // pred_fallthru
          _
        // Predicated region
        $region21: #{tpu_custom_call.1} parent=15 // pred_check
          %p211 = pneg %p85
        $region22: #{tpu_custom_call.1} parent=15 // pred_check_branch
          %213 = sbr.rel (%p211) target = $region24
        $region23: #{tpu_custom_call.1} parent=15 // pred_region
          %s214 = sand.u32 %s75, 1
          %s215 = scalar_lea.sflag [#allocation6], %s214
          %s216 = sand.u32 %s75, 1
          %s217 = smul.addr %s216, 8
          %s218 = scalar_lea.vmem [#allocation5], %s217
          %220 = vsyncadd %s215, 0
          %s221 = smul.addr %s30, 4
          %s222 = sadd.s32 %s31, %s221
          %s223 = smul.addr %s222, 2
          %s224 = scalar_lea.hbm %s1, %s223
          %s225 = sshll.u32 %s224, 4
          %s226 = int_to_ptr.hbm [resolvable:$true] %s225
          %s227 = sshll.u32 %s218, 4
          %s228 = int_to_ptr.vmem [resolvable:$true] %s227
          %233 = dma.hbm_to_vmem [thread:$0]  %s226, 128, %s228, %s215, 32, 32, 2
        $region24: #{tpu_custom_call.1} parent=15 // pred_fallthru
          _
      $region16: #{tpu_custom_call.1} parent=5 // pred_fallthru
        _
      %p234 = scmp.le.s32.totalorder 1, %s23
      %p235 = scmp.lt.s32.totalorder %s23, 3
      %p236 = pnand %p234, %p235
      %p237 = pneg %p236
      // Predicated region
      $region25: #{tpu_custom_call.1} parent=5 // pred_check
        _
      $region26: #{tpu_custom_call.1} parent=5 // pred_check_branch
        %239 = sbr.rel (%p236) target = $region28
      $region27: #{tpu_custom_call.1} parent=5 // pred_region
        %s240 = ssub.s32 %s23, 1
        %s241 = sand.u32 %s50, 1
        %s242 = scalar_lea.sflag [#allocation3], %s241
        %s243 = sand.u32 %s50, 1
        %s244 = smul.addr %s243, 8
        %s245 = scalar_lea.vmem [#allocation2], %s244
        // Predicated region
        $region29: #{tpu_custom_call.1} parent=27 // pred_check
          %p246 = pneg %p63
        $region30: #{tpu_custom_call.1} parent=27 // pred_check_branch
          %248 = sbr.rel (%p246) target = $region32
        $region31: #{tpu_custom_call.1} parent=27 // pred_region
          %250 = dma.done %s242, 128
        $region32: #{tpu_custom_call.1} parent=27 // pred_fallthru
          _
        %s251 = sand.u32 %s78, 1
        %s252 = scalar_lea.sflag [#allocation6], %s251
        %s253 = sand.u32 %s78, 1
        %s254 = smul.addr %s253, 8
        %s255 = scalar_lea.vmem [#allocation5], %s254
        // Predicated region
        $region33: #{tpu_custom_call.1} parent=27 // pred_check
          %p256 = pneg %p91
        $region34: #{tpu_custom_call.1} parent=27 // pred_check_branch
          %258 = sbr.rel (%p256) target = $region36
        $region35: #{tpu_custom_call.1} parent=27 // pred_region
          %260 = dma.done %s252, 128
        $region36: #{tpu_custom_call.1} parent=27 // pred_fallthru
          _
        %s261 = sand.u32 %s50, 1
        %s262 = scalar_lea.sflag [#allocation3], %s261
        %s263 = sand.u32 %s50, 1
        %s264 = smul.addr %s263, 8
        %s265 = scalar_lea.vmem [#allocation2], %s264
        %p266 = pneg %p63
        %p267 = pneg %p60
        %s268 = sand.u32 %s78, 1
        %s269 = scalar_lea.sflag [#allocation6], %s268
        %s270 = sand.u32 %s78, 1
        %s271 = smul.addr %s270, 8
        %s272 = scalar_lea.vmem [#allocation5], %s271
        %p273 = pneg %p91
        %p274 = pneg %p88
        %p275 = pneg %p117
        %p276 = pneg %p114
        %s277 = sand.u32 %s104, 1
        %s278 = scalar_lea.sflag [#allocation4], %s277
        %s279 = sand.u32 %s104, 1
        %s280 = smul.addr %s279, 4
        %s281 = scalar_lea.vmem [#allocation7], %s280
        %p282 = pneg %p143
        %p283 = pneg %p140
        %s284 = sand.u32 %s28, 1
        %s285 = scalar_lea.sflag [#allocation9], %s284
        %s286 = sand.u32 %s130, 1
        %s287 = smul.addr %s286, 4
        %s288 = scalar_lea.vmem [#allocation8], %s287
        %p289 = pneg %p169
        %p290 = pneg %p166
        %s291 = sand.u32 %s28, 1
        %s292 = scalar_lea.sflag [#allocation9], %s291
        %s293 = sand.u32 %s156, 1
        %s294 = smul.addr %s293, 4
        %s295 = scalar_lea.vmem [#allocation10], %s294
        %p296 = scmp.eq.s32.totalorder %s33, 0
        // Predicated region
        $region37: #{tpu_custom_call.1} parent=27 // pred_check
          %p297 = pneg %p296
        $region38: #{tpu_custom_call.1} parent=27 // pred_check_branch
          %299 = sbr.rel (%p297) target = $region40
        $region39: #{tpu_custom_call.1} parent=27 // pred_region
          %300 = vst [vmem:[%s281] sm:$0xf] 0.0
          %301 = vst [vmem:[%s288] sm:$0xf] 0.0
          %302 = vst [vmem:[%s295] sm:$0xf] 0.0
        $region40: #{tpu_custom_call.1} parent=27 // pred_fallthru
          _
        %v303 = vld [vmem:[%s245] sm:$0x3]
        %v304 = vld [vmem:[%s245 + $0x2] sm:$0x3]
        %v305 = vld [vmem:[%s245 + $0x4] sm:$0x3]
        %v306 = vld [vmem:[%s245 + $0x6] sm:$0x3]
        %v307 = vld [vmem:[%s255] sm:$0x3]
        %v308 = vld [vmem:[%s255 + $0x2] sm:$0x3]
        %v309 = vld [vmem:[%s255 + $0x4] sm:$0x3]
        %v310 = vld [vmem:[%s255 + $0x6] sm:$0x3]
        %v311 = vld [vmem:[%s281] sm:$0xf]
        %v312 = vmul.f32 %v303, %v307
        %v313 = vmul.f32 %v304, %v308
        %v314 = vmul.f32 %v305, %v309
        %v315 = vmul.f32 %v306, %v310
        %vm316 = vcmask 1041408
        %v317 = vsel %vm316, %v312, 0.0
        %v318 = vrot.slane %v317, 4
        %v319 = vadd.f32 %v317, %v318
        %v320 = vrot.slane %v319, 2
        %v321 = vadd.f32 %v319, %v320
        %v322 = vrot.slane %v321, 1
        %v323 = vadd.f32 %v321, %v322
        %v324 = vsel %vm316, %v313, 0.0
        %v325 = vrot.slane %v324, 4
        %v326 = vadd.f32 %v324, %v325
        %v327 = vrot.slane %v326, 2
        %v328 = vadd.f32 %v326, %v327
        %v329 = vrot.slane %v328, 1
        %v330 = vadd.f32 %v328, %v329
        %v331 = vsel %vm316, %v314, 0.0
        %v332 = vrot.slane %v331, 4
        %v333 = vadd.f32 %v331, %v332
        %v334 = vrot.slane %v333, 2
        %v335 = vadd.f32 %v333, %v334
        %v336 = vrot.slane %v335, 1
        %v337 = vadd.f32 %v335, %v336
        %v338 = vsel %vm316, %v315, 0.0
        %v339 = vrot.slane %v338, 4
        %v340 = vadd.f32 %v338, %v339
        %v341 = vrot.slane %v340, 2
        %v342 = vadd.f32 %v340, %v341
        %v343 = vrot.slane %v342, 1
        %v344 = vadd.f32 %v342, %v343
        %vm349 = vcmask 1041409
        %v350 = vsel %vm349, %v330, %v323
        %vm351 = vcmask 1042434
        %v352 = vsel %vm351, %v337, %v350
        %vm353 = vcmask 1043459
        %v354 = vsel %vm353, %v344, %v352
        %v356 = vadd.f32 %v311, %v354
        %357 = vst [vmem:[%s281] sm:$0xf] %v356
        %v358 = vld [vmem:[%s288] sm:$0xf]
        %v359 = vsel %vm316, %v303, 0.0
        %v360 = vrot.slane %v359, 4
        %v361 = vadd.f32 %v359, %v360
        %v362 = vrot.slane %v361, 2
        %v363 = vadd.f32 %v361, %v362
        %v364 = vrot.slane %v363, 1
        %v365 = vadd.f32 %v363, %v364
        %v366 = vsel %vm316, %v304, 0.0
        %v367 = vrot.slane %v366, 4
        %v368 = vadd.f32 %v366, %v367
        %v369 = vrot.slane %v368, 2
        %v370 = vadd.f32 %v368, %v369
        %v371 = vrot.slane %v370, 1
        %v372 = vadd.f32 %v370, %v371
        %v373 = vsel %vm316, %v305, 0.0
        %v374 = vrot.slane %v373, 4
        %v375 = vadd.f32 %v373, %v374
        %v376 = vrot.slane %v375, 2
        %v377 = vadd.f32 %v375, %v376
        %v378 = vrot.slane %v377, 1
        %v379 = vadd.f32 %v377, %v378
        %v380 = vsel %vm316, %v306, 0.0
        %v381 = vrot.slane %v380, 4
        %v382 = vadd.f32 %v380, %v381
        %v383 = vrot.slane %v382, 2
        %v384 = vadd.f32 %v382, %v383
        %v385 = vrot.slane %v384, 1
        %v386 = vadd.f32 %v384, %v385
        %v391 = vsel %vm349, %v372, %v365
        %v392 = vsel %vm351, %v379, %v391
        %v393 = vsel %vm353, %v386, %v392
        %v395 = vadd.f32 %v358, %v393
        %396 = vst [vmem:[%s288] sm:$0xf] %v395
        %v397 = vld [vmem:[%s295] sm:$0xf]
        %v398 = vsel %vm316, %v307, 0.0
        %v399 = vrot.slane %v398, 4
        %v400 = vadd.f32 %v398, %v399
        %v401 = vrot.slane %v400, 2
        %v402 = vadd.f32 %v400, %v401
        %v403 = vrot.slane %v402, 1
        %v404 = vadd.f32 %v402, %v403
        %v405 = vsel %vm316, %v308, 0.0
        %v406 = vrot.slane %v405, 4
        %v407 = vadd.f32 %v405, %v406
        %v408 = vrot.slane %v407, 2
        %v409 = vadd.f32 %v407, %v408
        %v410 = vrot.slane %v409, 1
        %v411 = vadd.f32 %v409, %v410
        %v412 = vsel %vm316, %v309, 0.0
        %v413 = vrot.slane %v412, 4
        %v414 = vadd.f32 %v412, %v413
        %v415 = vrot.slane %v414, 2
        %v416 = vadd.f32 %v414, %v415
        %v417 = vrot.slane %v416, 1
        %v418 = vadd.f32 %v416, %v417
        %v419 = vsel %vm316, %v310, 0.0
        %v420 = vrot.slane %v419, 4
        %v421 = vadd.f32 %v419, %v420
        %v422 = vrot.slane %v421, 2
        %v423 = vadd.f32 %v421, %v422
        %v424 = vrot.slane %v423, 1
        %v425 = vadd.f32 %v423, %v424
        %v430 = vsel %vm349, %v411, %v404
        %v431 = vsel %vm351, %v418, %v430
        %v432 = vsel %vm353, %v425, %v431
        %v434 = vadd.f32 %v397, %v432
        %435 = vst [vmem:[%s295] sm:$0xf] %v434
        %s436 = sand.u32 %s104, 1
        %s437 = scalar_lea.sflag [#allocation4], %s436
        %s438 = sand.u32 %s104, 1
        %s439 = smul.addr %s438, 4
        %s440 = scalar_lea.vmem [#allocation7], %s439
        %s441 = sand.u32 %s28, 1
        %s442 = scalar_lea.sflag [#allocation9], %s441
        %s443 = sand.u32 %s130, 1
        %s444 = smul.addr %s443, 4
        %s445 = scalar_lea.vmem [#allocation8], %s444
        %s446 = sand.u32 %s28, 1
        %s447 = scalar_lea.sflag [#allocation9], %s446
        %s448 = sand.u32 %s156, 1
        %s449 = smul.addr %s448, 4
        %s450 = scalar_lea.vmem [#allocation10], %s449
        // Predicated region
        $region41: #{tpu_custom_call.1} parent=27 // pred_check
          %p451 = pneg %p114
        $region42: #{tpu_custom_call.1} parent=27 // pred_check_branch
          %453 = sbr.rel (%p451) target = $region44
        $region43: #{tpu_custom_call.1} parent=27 // pred_region
          %455 = vsyncadd %s437, 0
          %s456 = smul.addr %s32, 4
          %s457 = scalar_lea.hbm %s2, %s456
          %s459 = sshll.u32 %s440, 4
          %s460 = int_to_ptr.vmem [resolvable:$true] %s459
          %s461 = sshll.u32 %s457, 4
          %s462 = int_to_ptr.hbm [resolvable:$true] %s461
          %464 = dma.vmem_to_hbm [thread:$0]  %s460, 64, %s462, %s437
        $region44: #{tpu_custom_call.1} parent=27 // pred_fallthru
          _
        // Predicated region
        $region45: #{tpu_custom_call.1} parent=27 // pred_check
          %p465 = pneg %p140
        $region46: #{tpu_custom_call.1} parent=27 // pred_check_branch
          %467 = sbr.rel (%p465) target = $region48
        $region47: #{tpu_custom_call.1} parent=27 // pred_region
          %469 = vsyncadd %s442, 0
          %s470 = smul.addr %s32, 4
          %s471 = scalar_lea.hbm %s3, %s470
          %s473 = sshll.u32 %s445, 4
          %s474 = int_to_ptr.vmem [resolvable:$true] %s473
          %s475 = sshll.u32 %s471, 4
          %s476 = int_to_ptr.hbm [resolvable:$true] %s475
          %478 = dma.vmem_to_hbm [thread:$0]  %s474, 64, %s476, %s442
        $region48: #{tpu_custom_call.1} parent=27 // pred_fallthru
          _
        // Predicated region
        $region49: #{tpu_custom_call.1} parent=27 // pred_check
          %p479 = pneg %p166
        $region50: #{tpu_custom_call.1} parent=27 // pred_check_branch
          %481 = sbr.rel (%p479) target = $region52
        $region51: #{tpu_custom_call.1} parent=27 // pred_region
          %483 = vsyncadd %s447, 0
          %s484 = smul.addr %s32, 4
          %s485 = scalar_lea.hbm %s4, %s484
          %s487 = sshll.u32 %s450, 4
          %s488 = int_to_ptr.vmem [resolvable:$true] %s487
          %s489 = sshll.u32 %s485, 4
          %s490 = int_to_ptr.hbm [resolvable:$true] %s489
          %492 = dma.vmem_to_hbm [thread:$0]  %s488, 64, %s490, %s447
        $region52: #{tpu_custom_call.1} parent=27 // pred_fallthru
          _
      $region28: #{tpu_custom_call.1} parent=5 // pred_fallthru
        _
      %p493 = scmp.le.s32.totalorder 2, %s23
      // Predicated region
      $region53: #{tpu_custom_call.1} parent=5 // pred_check
        %p494 = pneg %p493
      $region54: #{tpu_custom_call.1} parent=5 // pred_check_branch
        %496 = sbr.rel (%p494) target = $region56
      $region55: #{tpu_custom_call.1} parent=5 // pred_region
        %s497 = ssub.s32 %s23, 2
        // Predicated region
        $region57: #{tpu_custom_call.1} parent=55 // pred_check
          %p498 = pneg %p120
        $region58: #{tpu_custom_call.1} parent=55 // pred_check_branch
          %500 = sbr.rel (%p498) target = $region60
        $region59: #{tpu_custom_call.1} parent=55 // pred_region
          %s501 = sand.u32 %s105, 1
          %s502 = scalar_lea.sflag [#allocation4], %s501
          %s503 = sand.u32 %s105, 1
          %s504 = smul.addr %s503, 4
          %s505 = scalar_lea.vmem [#allocation7], %s504
          %507 = dma.done %s502, 64
        $region60: #{tpu_custom_call.1} parent=55 // pred_fallthru
          _
        // Predicated region
        $region61: #{tpu_custom_call.1} parent=55 // pred_check
          %p508 = pneg %p146
        $region62: #{tpu_custom_call.1} parent=55 // pred_check_branch
          %510 = sbr.rel (%p508) target = $region64
        $region63: #{tpu_custom_call.1} parent=55 // pred_region
          %s511 = sand.u32 %s29, 1
          %s512 = scalar_lea.sflag [#allocation9], %s511
          %s513 = sand.u32 %s131, 1
          %s514 = smul.addr %s513, 4
          %s515 = scalar_lea.vmem [#allocation8], %s514
          %517 = dma.done %s512, 64
        $region64: #{tpu_custom_call.1} parent=55 // pred_fallthru
          _
        // Predicated region
        $region65: #{tpu_custom_call.1} parent=55 // pred_check
          %p518 = pneg %p172
        $region66: #{tpu_custom_call.1} parent=55 // pred_check_branch
          %520 = sbr.rel (%p518) target = $region68
        $region67: #{tpu_custom_call.1} parent=55 // pred_region
          %s521 = sand.u32 %s29, 1
          %s522 = scalar_lea.sflag [#allocation9], %s521
          %s523 = sand.u32 %s157, 1
          %s524 = smul.addr %s523, 4
          %s525 = scalar_lea.vmem [#allocation10], %s524
          %527 = dma.done %s522, 64
        $region68: #{tpu_custom_call.1} parent=55 // pred_fallthru
          _
      $region56: #{tpu_custom_call.1} parent=5 // pred_fallthru
        _
    $region6: #{tpu_custom_call.1} parent=1 // loop_footer
      %s27 = sadd.s32 1, %s23
    $region7: #{tpu_custom_call.1} parent=1 // loop_footer_branch
      %22 = sbr.rel target = $region3
    $region8: #{tpu_custom_call.1} parent=1 // loop_exit
      _
    %528 = vsyncpa [#allocation3], 1
    %s529 = scalar_lea.sflag [#allocation3], 1
    %530 = vsyncpa %s529, 1
    %531 = vsyncpa [#allocation6], 1
    %s532 = scalar_lea.sflag [#allocation6], 1
    %533 = vsyncpa %s532, 1
    %534 = vsyncpa [#allocation4], 1
    %s535 = scalar_lea.sflag [#allocation4], 1
    %536 = vsyncpa %s535, 1
    %537 = vsyncpa [#allocation9], 1
    %s538 = scalar_lea.sflag [#allocation9], 1
    %539 = vsyncpa %s538, 1

</llo_original>
